<compile_context>
chip_gen: v7x
topology: tpu7x:2x2x1
jax: 0.10.0
libtpu: 0.0.40
codegen_flags: <defaults>
</compile_context>

<pallas_src>
import jax
import jax.numpy as jnp
from jax.experimental import pallas as pl
from jax.experimental.pallas import tpu as pltpu

LANE = 128  # TPU vreg lane width -> batch-tile granularity (lane axis)
SUB = 16    # feature-dim padding granularity (covers f32 and bf16 sublane packing)


def _round_up(n, m):
    return (n + m - 1) // m * m


def fnn_kernel(x_ref, w1_ref, b1_ref, w2_ref, b2_ref, w3_ref, b3_ref, o_ref):
    """One batch tile (transposed layout): three MXU matmuls + VPU bias/ReLU."""
    cdt = w1_ref.dtype  # compute dtype of the MXU inputs (f32 or bf16)

    x_t = x_ref[...]                                                # (F_pad, TB)
    h1 = jnp.dot(w1_ref[...], x_t, preferred_element_type=jnp.float32)
    h1 = jnp.maximum(h1 + b1_ref[...], 0.0)                         # (H1, TB) f32

    h2 = jnp.dot(w2_ref[...], h1.astype(cdt), preferred_element_type=jnp.float32)
    h2 = jnp.maximum(h2 + b2_ref[...], 0.0)                         # (H2, TB) f32

    y = jnp.dot(w3_ref[...], h2.astype(cdt), preferred_element_type=jnp.float32)
    y = y + b3_ref[...]                                             # (OUT_pad, TB) f32

    n_out = o_ref.shape[0]
    o_ref[...] = y[:n_out, :].astype(o_ref.dtype)                   # lane-dense store


def pad_params_t(params, compute_dtype):
    """Transpose each layer and zero-pad feature dims to SUB multiples (exact)."""
    w1, b1, w2, b2, w3, b3 = params

    def pad_t(w, b):
        fin, fout = w.shape
        fi_p, fo_p = _round_up(fin, SUB), _round_up(fout, SUB)
        wt = jnp.pad(w.T, ((0, fo_p - fout), (0, fi_p - fin))).astype(compute_dtype)
        bt = jnp.pad(b.reshape(fout, 1), ((0, fo_p - fout), (0, 0))).astype(jnp.float32)
        return wt, bt

    w1t, b1t = pad_t(w1, b1)
    w2t, b2t = pad_t(w2, b2)
    w3t, b3t = pad_t(w3, b3)
    return w1t, b1t, w2t, b2t, w3t, b3t


def fnn_forward(x, params, *, compute_dtype=jnp.float32, batch_tile=1024):
    """Fused FNN forward.  x: [B, F] f32.  Returns [B, 1] f32.

    compute_dtype=jnp.bfloat16 is recommended on v6e/v7x (accumulation stays
    f32 via preferred_element_type; biases remain f32).
    """
    w1, b1, w2, b2, w3, b3 = params
    B, F = x.shape
    out_features = w3.shape[1]  # logical output width (1)

    w1t, b1t, w2t, b2t, w3t, b3t = pad_params_t(params, compute_dtype)
    F_pad = w1t.shape[1]

    # Batch tiling: TB lanes per grid step (multiple of 128).
    TB = min(_round_up(batch_tile, LANE), _round_up(B, LANE))
    B_pad = _round_up(B, TB)
    grid = (B_pad // TB,)

    # Wrapper-side layout plumbing: transpose + pad x to (F_pad, B_pad).
    x_t = jnp.pad(x.astype(compute_dtype).T, ((0, F_pad - F), (0, B_pad - B)))

    def resident(arr):
        # Constant block index => loaded into VMEM once, reused by every tile.
        return pl.BlockSpec(arr.shape, lambda i: (0, 0))

    in_specs = [
        pl.BlockSpec((F_pad, TB), lambda i: (0, i)),  # x^T: streamed tile-by-tile
        resident(w1t), resident(b1t),
        resident(w2t), resident(b2t),
        resident(w3t), resident(b3t),
    ]
    out_specs = pl.BlockSpec((out_features, TB), lambda i: (0, i))

    # Scheduling hint: logical flops, actual bytes moved.
    h1, h2 = w1.shape[1], w2.shape[1]
    flops = 2 * B * (F * h1 + h1 * h2 + h2 * out_features)
    param_bytes = sum(int(p.size) * p.dtype.itemsize
                      for p in (w1t, b1t, w2t, b2t, w3t, b3t))
    bytes_accessed = (int(x_t.size) * x_t.dtype.itemsize + param_bytes
                      + out_features * B_pad * 4)
    cost = pl.CostEstimate(flops=flops, transcendentals=0,
                           bytes_accessed=bytes_accessed)

    out_t = pl.pallas_call(
        fnn_kernel,
        out_shape=jax.ShapeDtypeStruct((out_features, B_pad), jnp.float32),
        grid=grid,
        in_specs=in_specs,
        out_specs=out_specs,
        compiler_params=pltpu.CompilerParams(
            dimension_semantics=("parallel",),
        ),
        cost_estimate=cost,
    )(x_t, w1t, b1t, w2t, b2t, w3t, b3t)

    # Padded batch columns are discarded; return in the original [B, out] layout.
    return out_t[:, :B].T


def init_params(key, in_features):
    # Deterministic init mimicking PyTorch nn.Linear default:
    # U(-1/sqrt(fan_in), 1/sqrt(fan_in)) for both weight and bias.
    dims = [(in_features, 64), (64, 32), (32, 1)]
    params = []
    for (fan_in, fan_out) in dims:
        key, kw, kb = jax.random.split(key, 3)
        bound = 1.0 / jnp.sqrt(jnp.float32(fan_in))
        # stored as [in, out] (transposed vs. PyTorch's [out, in])
        w = jax.random.uniform(kw, (fan_in, fan_out), jnp.float32, -bound, bound)
        b = jax.random.uniform(kb, (1, fan_out), jnp.float32, -bound, bound)
        params += [w, b]
    return tuple(params)


def fnn_reference(x, params):
    w1, b1, w2, b2, w3, b3 = params
    h1 = jnp.maximum(x @ w1 + b1, 0.0)
    h2 = jnp.maximum(h1 @ w2 + b2, 0.0)
    return h2 @ w3 + b3


if __name__ == "__main__":
    key = jax.random.PRNGKey(0)
    key, kx1, kx2 = jax.random.split(key, 3)

    in_features = 16  # stands in for X_train.shape[1]
    params = init_params(key, in_features)

    # Small case (single grid step, batch padded to one lane tile).
    x_small = jax.random.normal(kx1, (8, in_features), jnp.float32)
    out_small = jax.block_until_ready(fnn_forward(x_small, params))
    ref_small = fnn_reference(x_small, params)
    assert out_small.shape == (8, 1)
    assert jnp.allclose(out_small, ref_small, atol=1e-4, rtol=1e-4)

    # Larger, non-multiple batch: exercises the batch grid + column padding.
    x_big = jax.random.normal(kx2, (1000, in_features), jnp.float32)
    out_big = jax.block_until_ready(fnn_forward(x_big, params, batch_tile=512))
    ref_big = fnn_reference(x_big, params)
    assert out_big.shape == (1000, 1)
    assert jnp.allclose(out_big, ref_big, atol=1e-4, rtol=1e-4)

    # bf16 compute path (v6e/v7x-friendly): f32 accumulation, loose tolerance.
    out_bf16 = jax.block_until_ready(
        fnn_forward(x_big, params, compute_dtype=jnp.bfloat16, batch_tile=512))
    assert out_bf16.shape == (1000, 1)
    assert jnp.allclose(out_bf16, ref_big, atol=1e-1, rtol=1e-1)

    print("KERNEL_OK")
</pallas_src>

<mosaic_0001>
module attributes {stable_mosaic.version = 11 : i64} {
  func.func @fnn_kernel(%arg0: i32, %arg1: memref<16x128xf32, #tpu.memory_space<vmem>>, %arg2: memref<64x16xf32, #tpu.memory_space<vmem>>, %arg3: memref<64x1xf32, #tpu.memory_space<vmem>>, %arg4: memref<32x64xf32, #tpu.memory_space<vmem>>, %arg5: memref<32x1xf32, #tpu.memory_space<vmem>>, %arg6: memref<16x32xf32, #tpu.memory_space<vmem>>, %arg7: memref<16x1xf32, #tpu.memory_space<vmem>>, %arg8: memref<1x128xf32, #tpu.memory_space<vmem>>) attributes {dimension_semantics = [#tpu.dimension_semantics<parallel>], iteration_bounds = array<i64: 1>, scalar_prefetch = 0 : i64, scratch_operands = 0 : i64, tpu.core_type = #tpu.core_type<tc>, window_params = [{transform_indices = @transform_0, window_bounds = array<i64: 16, 128>}, {pipeline_mode = #tpu.pipeline_mode<synchronous>, transform_indices = @transform_1, window_bounds = array<i64: 64, 16>}, {pipeline_mode = #tpu.pipeline_mode<synchronous>, transform_indices = @transform_2, window_bounds = array<i64: 64, 1>}, {pipeline_mode = #tpu.pipeline_mode<synchronous>, transform_indices = @transform_3, window_bounds = array<i64: 32, 64>}, {pipeline_mode = #tpu.pipeline_mode<synchronous>, transform_indices = @transform_4, window_bounds = array<i64: 32, 1>}, {pipeline_mode = #tpu.pipeline_mode<synchronous>, transform_indices = @transform_5, window_bounds = array<i64: 16, 32>}, {pipeline_mode = #tpu.pipeline_mode<synchronous>, transform_indices = @transform_6, window_bounds = array<i64: 16, 1>}, {transform_indices = @transform_7, window_bounds = array<i64: 1, 128>}]} {
    %c0 = arith.constant 0 : index
    %c0_0 = arith.constant 0 : index
    %0 = vector.load %arg1[%c0, %c0_0] : memref<16x128xf32, #tpu.memory_space<vmem>>, vector<16x128xf32>
    %c0_1 = arith.constant 0 : index
    %c0_2 = arith.constant 0 : index
    %1 = vector.load %arg2[%c0_1, %c0_2] : memref<64x16xf32, #tpu.memory_space<vmem>>, vector<64x16xf32>
    %cst = arith.constant dense<0.000000e+00> : vector<64x128xf32>
    %2 = tpu.matmul %1, %0, %cst {dimension_numbers = #tpu.dot_dimension_numbers<[1], [0], [0], [1], [0, 0, 1, 1], [], []>} : vector<64x16xf32>, vector<16x128xf32>, vector<64x128xf32> -> vector<64x128xf32>
    %c0_3 = arith.constant 0 : index
    %c0_4 = arith.constant 0 : index
    %3 = vector.load %arg3[%c0_3, %c0_4] : memref<64x1xf32, #tpu.memory_space<vmem>>, vector<64x1xf32>
    %4 = vector.broadcast %3 : vector<64x1xf32> to vector<64x128xf32>
    %5 = arith.addf %2, %4 : vector<64x128xf32>
    %cst_5 = arith.constant 0.000000e+00 : f32
    %6 = vector.broadcast %cst_5 : f32 to vector<64x128xf32>
    %7 = arith.maximumf %5, %6 : vector<64x128xf32>
    %c0_6 = arith.constant 0 : index
    %c0_7 = arith.constant 0 : index
    %8 = vector.load %arg4[%c0_6, %c0_7] : memref<32x64xf32, #tpu.memory_space<vmem>>, vector<32x64xf32>
    %cst_8 = arith.constant dense<0.000000e+00> : vector<32x128xf32>
    %9 = tpu.matmul %8, %7, %cst_8 {dimension_numbers = #tpu.dot_dimension_numbers<[1], [0], [0], [1], [0, 0, 1, 1], [], []>} : vector<32x64xf32>, vector<64x128xf32>, vector<32x128xf32> -> vector<32x128xf32>
    %c0_9 = arith.constant 0 : index
    %c0_10 = arith.constant 0 : index
    %10 = vector.load %arg5[%c0_9, %c0_10] : memref<32x1xf32, #tpu.memory_space<vmem>>, vector<32x1xf32>
    %11 = vector.broadcast %10 : vector<32x1xf32> to vector<32x128xf32>
    %12 = arith.addf %9, %11 : vector<32x128xf32>
    %cst_11 = arith.constant 0.000000e+00 : f32
    %13 = vector.broadcast %cst_11 : f32 to vector<32x128xf32>
    %14 = arith.maximumf %12, %13 : vector<32x128xf32>
    %c0_12 = arith.constant 0 : index
    %c0_13 = arith.constant 0 : index
    %15 = vector.load %arg6[%c0_12, %c0_13] : memref<16x32xf32, #tpu.memory_space<vmem>>, vector<16x32xf32>
    %cst_14 = arith.constant dense<0.000000e+00> : vector<16x128xf32>
    %16 = tpu.matmul %15, %14, %cst_14 {dimension_numbers = #tpu.dot_dimension_numbers<[1], [0], [0], [1], [0, 0, 1, 1], [], []>} : vector<16x32xf32>, vector<32x128xf32>, vector<16x128xf32> -> vector<16x128xf32>
    %c0_15 = arith.constant 0 : index
    %c0_16 = arith.constant 0 : index
    %17 = vector.load %arg7[%c0_15, %c0_16] : memref<16x1xf32, #tpu.memory_space<vmem>>, vector<16x1xf32>
    %18 = vector.broadcast %17 : vector<16x1xf32> to vector<16x128xf32>
    %19 = arith.addf %16, %18 : vector<16x128xf32>
    %20 = vector.extract_strided_slice %19 {offsets = [0, 0], sizes = [1, 128], strides = [1, 1]} : vector<16x128xf32> to vector<1x128xf32>
    %c0_17 = arith.constant 0 : index
    %c0_18 = arith.constant 0 : index
    %21 = vector.load %arg8[%c0_17, %c0_18] : memref<1x128xf32, #tpu.memory_space<vmem>>, vector<1x128xf32>
    tpu.vector_store %arg8[%c0_17, %c0_18], %20 {strides = array<i32>} : memref<1x128xf32, #tpu.memory_space<vmem>>, vector<1x128xf32>,
    return
  }
  func.func @transform_0(%arg0: i32) -> (i32, i32) {
    %c0_i32 = arith.constant 0 : i32
    %c0_i32_0 = arith.constant 0 : i32
    return %c0_i32, %arg0 : i32, i32
  }
  func.func @transform_1(%arg0: i32) -> (i32, i32) {
    %c0_i32 = arith.constant 0 : i32
    %c0_i32_0 = arith.constant 0 : i32
    %c0_i32_1 = arith.constant 0 : i32
    return %c0_i32, %c0_i32_0 : i32, i32
  }
  func.func @transform_2(%arg0: i32) -> (i32, i32) {
    %c0_i32 = arith.constant 0 : i32
    %c0_i32_0 = arith.constant 0 : i32
    %c0_i32_1 = arith.constant 0 : i32
    return %c0_i32, %c0_i32_0 : i32, i32
  }
  func.func @transform_3(%arg0: i32) -> (i32, i32) {
    %c0_i32 = arith.constant 0 : i32
    %c0_i32_0 = arith.constant 0 : i32
    %c0_i32_1 = arith.constant 0 : i32
    return %c0_i32, %c0_i32_0 : i32, i32
  }
  func.func @transform_4(%arg0: i32) -> (i32, i32) {
    %c0_i32 = arith.constant 0 : i32
    %c0_i32_0 = arith.constant 0 : i32
    %c0_i32_1 = arith.constant 0 : i32
    return %c0_i32, %c0_i32_0 : i32, i32
  }
  func.func @transform_5(%arg0: i32) -> (i32, i32) {
    %c0_i32 = arith.constant 0 : i32
    %c0_i32_0 = arith.constant 0 : i32
    %c0_i32_1 = arith.constant 0 : i32
    return %c0_i32, %c0_i32_0 : i32, i32
  }
  func.func @transform_6(%arg0: i32) -> (i32, i32) {
    %c0_i32 = arith.constant 0 : i32
    %c0_i32_0 = arith.constant 0 : i32
    %c0_i32_1 = arith.constant 0 : i32
    return %c0_i32, %c0_i32_0 : i32, i32
  }
  func.func @transform_7(%arg0: i32) -> (i32, i32) {
    %c0_i32 = arith.constant 0 : i32
    %c0_i32_0 = arith.constant 0 : i32
    return %c0_i32, %arg0 : i32, i32
  }
}

</mosaic_0001>

<llo_original>
// kernel: tpu_custom_call.1
$region0: #{tpu_custom_call.1}
  #allocation0 [shape = 'u32[]', space=smem, size = 0x4, offset = 0x4, fixed_abs, tag = 'smem constant byte address 0x4 - core index']
  #allocation1 [shape = 'u32[144,128]{1,0:T(1,128)}', space=vmem, size = 0x12000, scoped, tag = 'internal scratch']
  %s0 = inlined_call_operand.vmem [shape: f32[16,128], index: 0, kind: input, shape index: {}]
  %s1 = inlined_call_operand.vmem [shape: f32[64,16], index: 1, kind: input, shape index: {}]
  %s2 = inlined_call_operand.vmem [shape: f32[64,1], index: 2, kind: input, shape index: {}]
  %s3 = inlined_call_operand.vmem [shape: f32[32,64], index: 3, kind: input, shape index: {}]
  %s4 = inlined_call_operand.vmem [shape: f32[32,1], index: 4, kind: input, shape index: {}]
  %s5 = inlined_call_operand.vmem [shape: f32[16,32], index: 5, kind: input, shape index: {}]
  %s6 = inlined_call_operand.vmem [shape: f32[16,1], index: 6, kind: input, shape index: {}]
  %s7 = inlined_call_operand.hbm [shape: f32[1,128], index: 7, kind: output, shape index: {}]
  %s8 = sld [smem:[#allocation0]]
  $region38: #{tpu_custom_call.1} parent=0
    _
  %s10 = ssub.s32 1, %s8
  %s11 = scalar_select 0, %s10, %s8
  $region1: #{tpu_custom_call.1} parent=0
    #allocation2 [shape = 'u8[512]{0}', space=vmem, size = 0x400, scoped, tag = 'output window, operand 0, single buffered']
    #allocation3 [shape = 's32[1]{0}', space=sflag, size = 0x4, scoped, tag = 'scoped memory for tpu_custom_call.1']
    %12 = vsyncpa [#allocation3], 0
    // Predicated region
    $region2: #{tpu_custom_call.1} parent=1 // pred_check
      _
    $region3: #{tpu_custom_call.1} parent=1 // pred_check_branch
      %14 = sbr.rel (0) target = $region5
    $region4: #{tpu_custom_call.1} parent=1 // pred_region
      _
    $region5: #{tpu_custom_call.1} parent=1 // pred_fallthru
      _
    // Predicated region
    $region6: #{tpu_custom_call.1} parent=1 // pred_check
      _
    $region7: #{tpu_custom_call.1} parent=1 // pred_check_branch
      %16 = sbr.rel (0) target = $region9
    $region8: #{tpu_custom_call.1} parent=1 // pred_region
      _
    $region9: #{tpu_custom_call.1} parent=1 // pred_fallthru
      _
    // Predicated region
    $region10: #{tpu_custom_call.1} parent=1 // pred_check
      _
    $region11: #{tpu_custom_call.1} parent=1 // pred_check_branch
      %18 = sbr.rel (0) target = $region13
    $region12: #{tpu_custom_call.1} parent=1 // pred_region
      _
    $region13: #{tpu_custom_call.1} parent=1 // pred_fallthru
      _
    // Predicated region
    $region14: #{tpu_custom_call.1} parent=1 // pred_check
      _
    $region15: #{tpu_custom_call.1} parent=1 // pred_check_branch
      %20 = sbr.rel (0) target = $region17
    $region16: #{tpu_custom_call.1} parent=1 // pred_region
      _
    $region17: #{tpu_custom_call.1} parent=1 // pred_fallthru
      _
    // Predicated region
    $region18: #{tpu_custom_call.1} parent=1 // pred_check
      _
    $region19: #{tpu_custom_call.1} parent=1 // pred_check_branch
      %22 = sbr.rel (0) target = $region21
    $region20: #{tpu_custom_call.1} parent=1 // pred_region
      _
    $region21: #{tpu_custom_call.1} parent=1 // pred_fallthru
      _
    // Predicated region
    $region22: #{tpu_custom_call.1} parent=1 // pred_check
      _
    $region23: #{tpu_custom_call.1} parent=1 // pred_check_branch
      %24 = sbr.rel (0) target = $region25
    $region24: #{tpu_custom_call.1} parent=1 // pred_region
      _
    $region25: #{tpu_custom_call.1} parent=1 // pred_fallthru
      _
    // Predicated region
    $region26: #{tpu_custom_call.1} parent=1 // pred_check
      _
    $region27: #{tpu_custom_call.1} parent=1 // pred_check_branch
      %26 = sbr.rel (0) target = $region29
    $region28: #{tpu_custom_call.1} parent=1 // pred_region
      _
    $region29: #{tpu_custom_call.1} parent=1 // pred_fallthru
      _
    %v27 = vld [vmem:[%s0] sm:$0xff]
    %v28 = vld [vmem:[%s0 + $0x8] sm:$0xff]
    %v29 = vld [vmem:[%s1] sm:$0xff]
    %v30 = vld [vmem:[%s1 + $0x8] sm:$0xff]
    %v31 = vld [vmem:[%s1 + $0x10] sm:$0xff]
    %v32 = vld [vmem:[%s1 + $0x18] sm:$0xff]
    %v33 = vld [vmem:[%s1 + $0x20] sm:$0xff]
    %v34 = vld [vmem:[%s1 + $0x28] sm:$0xff]
    %v35 = vld [vmem:[%s1 + $0x30] sm:$0xff]
    %v36 = vld [vmem:[%s1 + $0x38] sm:$0xff]
    %v37 = vld [vmem:[%s2] sm:$0xff]
    %v38 = vld [vmem:[%s2 + $0x8] sm:$0xff]
    %v39 = vld [vmem:[%s2 + $0x10] sm:$0xff]
    %v40 = vld [vmem:[%s2 + $0x18] sm:$0xff]
    %v41 = vld [vmem:[%s2 + $0x20] sm:$0xff]
    %v42 = vld [vmem:[%s2 + $0x28] sm:$0xff]
    %v43 = vld [vmem:[%s2 + $0x30] sm:$0xff]
    %v44 = vld [vmem:[%s2 + $0x38] sm:$0xff]
    %46 = vset.pattern.permute.xlu0 0
    %47 = vperm.xlu0 %46, %v37
    %v48 = vpop.permute.xlu0 %47
    %51 = vset.pattern.permute.xlu0 0
    %52 = vperm.xlu0 %51, %v38
    %v53 = vpop.permute.xlu0 %52
    %56 = vset.pattern.permute.xlu0 0
    %57 = vperm.xlu0 %56, %v39
    %v58 = vpop.permute.xlu0 %57
    %61 = vset.pattern.permute.xlu0 0
    %62 = vperm.xlu0 %61, %v40
    %v63 = vpop.permute.xlu0 %62
    %66 = vset.pattern.permute.xlu0 0
    %67 = vperm.xlu0 %66, %v41
    %v68 = vpop.permute.xlu0 %67
    %71 = vset.pattern.permute.xlu0 0
    %72 = vperm.xlu0 %71, %v42
    %v73 = vpop.permute.xlu0 %72
    %76 = vset.pattern.permute.xlu0 0
    %77 = vperm.xlu0 %76, %v43
    %v78 = vpop.permute.xlu0 %77
    %81 = vset.pattern.permute.xlu0 0
    %82 = vperm.xlu0 %81, %v44
    %v83 = vpop.permute.xlu0 %82
    %vm85 = vcmask 130048
    %v87 = vsel %vm85, %v29, 0
    %v90 = vsel %vm85, %v30, 0
    %v93 = vsel %vm85, %v31, 0
    %v96 = vsel %vm85, %v32, 0
    %v99 = vsel %vm85, %v33, 0
    %v102 = vsel %vm85, %v34, 0
    %v105 = vsel %vm85, %v35, 0
    %v108 = vsel %vm85, %v36, 0
    %110 = vmatprep.subr.mxu0 0.0
    %111 = vmatpush1.msra.mxu0 %v27
    %112 = vmatprep.subr.mxu0 0.0
    %113 = vmatpush1.msra.mxu0 %v28
    %114 = vmatprep.subr.mxu0 0.0
    %115 = vmatpush1.msra.mxu0 0.0
    %116 = vmatprep.subr.mxu0 0.0
    %117 = vmatpush1.msra.mxu0 0.0
    %118 = vmatprep.subr.mxu0 0.0
    %119 = vmatpush1.msra.mxu0 0.0
    %120 = vmatprep.subr.mxu0 0.0
    %121 = vmatpush1.msra.mxu0 0.0
    %122 = vmatprep.subr.mxu0 0.0
    %123 = vmatpush1.msra.mxu0 0.0
    %124 = vmatprep.subr.mxu0 0.0
    %125 = vmatpush1.msra.mxu0 0.0
    %126 = vmatprep.subr.mxu0 0.0
    %127 = vmatpush1.msra.mxu0 0.0
    %128 = vmatprep.subr.mxu0 0.0
    %129 = vmatpush1.msra.mxu0 0.0
    %130 = vmatprep.subr.mxu0 0.0
    %131 = vmatpush1.msra.mxu0 0.0
    %132 = vmatprep.subr.mxu0 0.0
    %133 = vmatpush1.msra.mxu0 0.0
    %134 = vmatprep.subr.mxu0 0.0
    %135 = vmatpush1.msra.mxu0 0.0
    %136 = vmatprep.subr.mxu0 0.0
    %137 = vmatpush1.msra.mxu0 0.0
    %138 = vmatprep.subr.mxu0 0.0
    %139 = vmatpush1.msra.mxu0 0.0
    %140 = vmatprep.subr.mxu0 0.0
    %141 = vmatpush1.msra.mxu0 0.0
    %142 = vmatprep.subr.mxu0 0.0
    %143 = vmatpush1.msra.mxu0 0.0
    %144 = vmatprep.subr.mxu0 0.0
    %145 = vmatpush1.msra.mxu0 0.0
    %146 = vmatprep.subr.mxu0 0.0
    %147 = vmatpush1.msra.mxu0 0.0
    %148 = vmatprep.subr.mxu0 0.0
    %149 = vmatpush1.msra.mxu0 0.0
    %150 = vmatprep.subr.mxu0 0.0
    %151 = vmatpush1.msra.mxu0 0.0
    %152 = vmatprep.subr.mxu0 0.0
    %153 = vmatpush1.msra.mxu0 0.0
    %154 = vmatprep.subr.mxu0 0.0
    %155 = vmatpush1.msra.mxu0 0.0
    %156 = vmatprep.subr.mxu0 0.0
    %157 = vmatpush1.msra.mxu0 0.0
    %158 = vmatprep.subr.mxu0 0.0
    %159 = vmatpush1.msra.mxu0 0.0
    %160 = vmatprep.subr.mxu0 0.0
    %161 = vmatpush1.msra.mxu0 0.0
    %162 = vmatprep.subr.mxu0 0.0
    %163 = vmatpush1.msra.mxu0 0.0
    %164 = vmatprep.subr.mxu0 0.0
    %165 = vmatpush1.msra.mxu0 0.0
    %166 = vmatprep.subr.mxu0 0.0
    %167 = vmatpush1.msra.mxu0 0.0
    %168 = vmatprep.subr.mxu0 0.0
    %169 = vmatpush1.msra.mxu0 0.0
    %170 = vmatprep.subr.mxu0 0.0
    %171 = vmatpush1.msra.mxu0 0.0
    %172 = vmatprep.subr.mxu0 0.0
    %173 = vmatpush1.msra.mxu0 0.0
    %174 = vmatprep.mubr.f32.mxu0 0.0
    %175 = vmatmul.mubr.f32.gmra.mrb[0].mxu0 %v87
    %v176 = vpop.f32.mrb[0].mxu0
    %v177 = vadd.f32 %v48, %v176
    %v178 = vpop.f32.mrb[0].mxu0
    %179 = vmatprep.mubr.f32.mxu0 0.0
    %180 = vmatmul.mubr.f32.gmra.mrb[0].mxu0 %v90
    %v181 = vpop.f32.mrb[0].mxu0
    %v182 = vadd.f32 %v53, %v181
    %v183 = vpop.f32.mrb[0].mxu0
    %184 = vmatprep.mubr.f32.mxu0 0.0
    %185 = vmatmul.mubr.f32.gmra.mrb[0].mxu0 %v93
    %v186 = vpop.f32.mrb[0].mxu0
    %v187 = vadd.f32 %v58, %v186
    %v188 = vpop.f32.mrb[0].mxu0
    %189 = vmatprep.mubr.f32.mxu0 0.0
    %190 = vmatmul.mubr.f32.gmra.mrb[0].mxu0 %v96
    %v191 = vpop.f32.mrb[0].mxu0
    %v192 = vadd.f32 %v63, %v191
    %v193 = vpop.f32.mrb[0].mxu0
    %194 = vmatprep.mubr.f32.mxu0 0.0
    %195 = vmatmul.mubr.f32.gmra.mrb[0].mxu0 %v99
    %v196 = vpop.f32.mrb[0].mxu0
    %v197 = vadd.f32 %v68, %v196
    %v198 = vpop.f32.mrb[0].mxu0
    %199 = vmatprep.mubr.f32.mxu0 0.0
    %200 = vmatmul.mubr.f32.gmra.mrb[0].mxu0 %v102
    %v201 = vpop.f32.mrb[0].mxu0
    %v202 = vadd.f32 %v73, %v201
    %v203 = vpop.f32.mrb[0].mxu0
    %204 = vmatprep.mubr.f32.mxu0 0.0
    %205 = vmatmul.mubr.f32.gmra.mrb[0].mxu0 %v105
    %v206 = vpop.f32.mrb[0].mxu0
    %v207 = vadd.f32 %v78, %v206
    %v208 = vpop.f32.mrb[0].mxu0
    %209 = vmatprep.mubr.f32.mxu0 0.0
    %210 = vmatmul.mubr.f32.gmra.mrb[0].mxu0 %v108
    %v211 = vpop.f32.mrb[0].mxu0
    %v212 = vadd.f32 %v83, %v211
    %v213 = vpop.f32.mrb[0].mxu0
    %214 = vdwg.mxu0
    %v215 = vmax.f32 %v177, 0.0
    %v216 = vmax.f32 %v182, 0.0
    %v217 = vmax.f32 %v187, 0.0
    %v218 = vmax.f32 %v192, 0.0
    %v219 = vmax.f32 %v197, 0.0
    %v220 = vmax.f32 %v202, 0.0
    %v221 = vmax.f32 %v207, 0.0
    %v222 = vmax.f32 %v212, 0.0
    %v223 = vld [vmem:[%s3] sm:$0xff]
    %v224 = vld [vmem:[%s3 + $0x8] sm:$0xff]
    %v225 = vld [vmem:[%s3 + $0x10] sm:$0xff]
    %v226 = vld [vmem:[%s3 + $0x18] sm:$0xff]
    %v227 = vld [vmem:[%s4] sm:$0xff]
    %v228 = vld [vmem:[%s4 + $0x8] sm:$0xff]
    %v229 = vld [vmem:[%s4 + $0x10] sm:$0xff]
    %v230 = vld [vmem:[%s4 + $0x18] sm:$0xff]
    %232 = vset.pattern.permute.xlu0 0
    %233 = vperm.xlu0 %232, %v227
    %v234 = vpop.permute.xlu0 %233
    %237 = vset.pattern.permute.xlu0 0
    %238 = vperm.xlu0 %237, %v228
    %v239 = vpop.permute.xlu0 %238
    %242 = vset.pattern.permute.xlu0 0
    %243 = vperm.xlu0 %242, %v229
    %v244 = vpop.permute.xlu0 %243
    %247 = vset.pattern.permute.xlu0 0
    %248 = vperm.xlu0 %247, %v230
    %v249 = vpop.permute.xlu0 %248
    %vm251 = vcmask 523264
    %v253 = vsel %vm251, %v223, 0
    %v256 = vsel %vm251, %v224, 0
    %v259 = vsel %vm251, %v225, 0
    %v262 = vsel %vm251, %v226, 0
    %264 = vmatprep.subr.mxu0 0.0
    %265 = vmatpush1.msra.mxu0 %v215
    %266 = vmatprep.subr.mxu0 0.0
    %267 = vmatpush1.msra.mxu0 %v216
    %268 = vmatprep.subr.mxu0 0.0
    %269 = vmatpush1.msra.mxu0 %v217
    %270 = vmatprep.subr.mxu0 0.0
    %271 = vmatpush1.msra.mxu0 %v218
    %272 = vmatprep.subr.mxu0 0.0
    %273 = vmatpush1.msra.mxu0 %v219
    %274 = vmatprep.subr.mxu0 0.0
    %275 = vmatpush1.msra.mxu0 %v220
    %276 = vmatprep.subr.mxu0 0.0
    %277 = vmatpush1.msra.mxu0 %v221
    %278 = vmatprep.subr.mxu0 0.0
    %279 = vmatpush1.msra.mxu0 %v222
    %280 = vmatprep.subr.mxu0 0.0
    %281 = vmatpush1.msra.mxu0 0.0
    %282 = vmatprep.subr.mxu0 0.0
    %283 = vmatpush1.msra.mxu0 0.0
    %284 = vmatprep.subr.mxu0 0.0
    %285 = vmatpush1.msra.mxu0 0.0
    %286 = vmatprep.subr.mxu0 0.0
    %287 = vmatpush1.msra.mxu0 0.0
    %288 = vmatprep.subr.mxu0 0.0
    %289 = vmatpush1.msra.mxu0 0.0
    %290 = vmatprep.subr.mxu0 0.0
    %291 = vmatpush1.msra.mxu0 0.0
    %292 = vmatprep.subr.mxu0 0.0
    %293 = vmatpush1.msra.mxu0 0.0
    %294 = vmatprep.subr.mxu0 0.0
    %295 = vmatpush1.msra.mxu0 0.0
    %296 = vmatprep.subr.mxu0 0.0
    %297 = vmatpush1.msra.mxu0 0.0
    %298 = vmatprep.subr.mxu0 0.0
    %299 = vmatpush1.msra.mxu0 0.0
    %300 = vmatprep.subr.mxu0 0.0
    %301 = vmatpush1.msra.mxu0 0.0
    %302 = vmatprep.subr.mxu0 0.0
    %303 = vmatpush1.msra.mxu0 0.0
    %304 = vmatprep.subr.mxu0 0.0
    %305 = vmatpush1.msra.mxu0 0.0
    %306 = vmatprep.subr.mxu0 0.0
    %307 = vmatpush1.msra.mxu0 0.0
    %308 = vmatprep.subr.mxu0 0.0
    %309 = vmatpush1.msra.mxu0 0.0
    %310 = vmatprep.subr.mxu0 0.0
    %311 = vmatpush1.msra.mxu0 0.0
    %312 = vmatprep.subr.mxu0 0.0
    %313 = vmatpush1.msra.mxu0 0.0
    %314 = vmatprep.subr.mxu0 0.0
    %315 = vmatpush1.msra.mxu0 0.0
    %316 = vmatprep.subr.mxu0 0.0
    %317 = vmatpush1.msra.mxu0 0.0
    %318 = vmatprep.subr.mxu0 0.0
    %319 = vmatpush1.msra.mxu0 0.0
    %320 = vmatprep.subr.mxu0 0.0
    %321 = vmatpush1.msra.mxu0 0.0
    %322 = vmatprep.subr.mxu0 0.0
    %323 = vmatpush1.msra.mxu0 0.0
    %324 = vmatprep.subr.mxu0 0.0
    %325 = vmatpush1.msra.mxu0 0.0
    %326 = vmatprep.subr.mxu0 0.0
    %327 = vmatpush1.msra.mxu0 0.0
    %328 = vmatprep.mubr.f32.mxu0 0.0
    %329 = vmatmul.mubr.f32.gmra.mrb[0].mxu0 %v253
    %v330 = vpop.f32.mrb[0].mxu0
    %v331 = vadd.f32 %v234, %v330
    %v332 = vpop.f32.mrb[0].mxu0
    %333 = vmatprep.mubr.f32.mxu0 0.0
    %334 = vmatmul.mubr.f32.gmra.mrb[0].mxu0 %v256
    %v335 = vpop.f32.mrb[0].mxu0
    %v336 = vadd.f32 %v239, %v335
    %v337 = vpop.f32.mrb[0].mxu0
    %338 = vmatprep.mubr.f32.mxu0 0.0
    %339 = vmatmul.mubr.f32.gmra.mrb[0].mxu0 %v259
    %v340 = vpop.f32.mrb[0].mxu0
    %v341 = vadd.f32 %v244, %v340
    %v342 = vpop.f32.mrb[0].mxu0
    %343 = vmatprep.mubr.f32.mxu0 0.0
    %344 = vmatmul.mubr.f32.gmra.mrb[0].mxu0 %v262
    %v345 = vpop.f32.mrb[0].mxu0
    %v346 = vadd.f32 %v249, %v345
    %v347 = vpop.f32.mrb[0].mxu0
    %348 = vdwg.mxu0
    %v349 = vmax.f32 %v331, 0.0
    %v350 = vmax.f32 %v336, 0.0
    %v351 = vmax.f32 %v341, 0.0
    %v352 = vmax.f32 %v346, 0.0
    %v353 = vld [vmem:[%s5] sm:$0xff]
    %v354 = vld [vmem:[%s5 + $0x8] sm:$0xff]
    %v355 = vld [vmem:[%s6] sm:$0xff]
    %v356 = vld [vmem:[%s6 + $0x8] sm:$0xff]
    %358 = vset.pattern.permute.xlu0 0
    %359 = vperm.xlu0 %358, %v355
    %v360 = vpop.permute.xlu0 %359
    %363 = vset.pattern.permute.xlu0 0
    %364 = vperm.xlu0 %363, %v356
    %v365 = vpop.permute.xlu0 %364
    %vm366 = vcmask 261120
    %v368 = vsel %vm366, %v353, 0
    %v371 = vsel %vm366, %v354, 0
    %373 = vmatprep.subr.mxu0 0.0
    %374 = vmatpush1.msra.mxu0 %v349
    %375 = vmatprep.subr.mxu0 0.0
    %376 = vmatpush1.msra.mxu0 %v350
    %377 = vmatprep.subr.mxu0 0.0
    %378 = vmatpush1.msra.mxu0 %v351
    %379 = vmatprep.subr.mxu0 0.0
    %380 = vmatpush1.msra.mxu0 %v352
    %381 = vmatprep.subr.mxu0 0.0
    %382 = vmatpush1.msra.mxu0 0.0
    %383 = vmatprep.subr.mxu0 0.0
    %384 = vmatpush1.msra.mxu0 0.0
    %385 = vmatprep.subr.mxu0 0.0
    %386 = vmatpush1.msra.mxu0 0.0
    %387 = vmatprep.subr.mxu0 0.0
    %388 = vmatpush1.msra.mxu0 0.0
    %389 = vmatprep.subr.mxu0 0.0
    %390 = vmatpush1.msra.mxu0 0.0
    %391 = vmatprep.subr.mxu0 0.0
    %392 = vmatpush1.msra.mxu0 0.0
    %393 = vmatprep.subr.mxu0 0.0
    %394 = vmatpush1.msra.mxu0 0.0
    %395 = vmatprep.subr.mxu0 0.0
    %396 = vmatpush1.msra.mxu0 0.0
    %397 = vmatprep.subr.mxu0 0.0
    %398 = vmatpush1.msra.mxu0 0.0
    %399 = vmatprep.subr.mxu0 0.0
    %400 = vmatpush1.msra.mxu0 0.0
    %401 = vmatprep.subr.mxu0 0.0
    %402 = vmatpush1.msra.mxu0 0.0
    %403 = vmatprep.subr.mxu0 0.0
    %404 = vmatpush1.msra.mxu0 0.0
    %405 = vmatprep.subr.mxu0 0.0
    %406 = vmatpush1.msra.mxu0 0.0
    %407 = vmatprep.subr.mxu0 0.0
    %408 = vmatpush1.msra.mxu0 0.0
    %409 = vmatprep.subr.mxu0 0.0
    %410 = vmatpush1.msra.mxu0 0.0
    %411 = vmatprep.subr.mxu0 0.0
    %412 = vmatpush1.msra.mxu0 0.0
    %413 = vmatprep.subr.mxu0 0.0
    %414 = vmatpush1.msra.mxu0 0.0
    %415 = vmatprep.subr.mxu0 0.0
    %416 = vmatpush1.msra.mxu0 0.0
    %417 = vmatprep.subr.mxu0 0.0
    %418 = vmatpush1.msra.mxu0 0.0
    %419 = vmatprep.subr.mxu0 0.0
    %420 = vmatpush1.msra.mxu0 0.0
    %421 = vmatprep.subr.mxu0 0.0
    %422 = vmatpush1.msra.mxu0 0.0
    %423 = vmatprep.subr.mxu0 0.0
    %424 = vmatpush1.msra.mxu0 0.0
    %425 = vmatprep.subr.mxu0 0.0
    %426 = vmatpush1.msra.mxu0 0.0
    %427 = vmatprep.subr.mxu0 0.0
    %428 = vmatpush1.msra.mxu0 0.0
    %429 = vmatprep.subr.mxu0 0.0
    %430 = vmatpush1.msra.mxu0 0.0
    %431 = vmatprep.subr.mxu0 0.0
    %432 = vmatpush1.msra.mxu0 0.0
    %433 = vmatprep.subr.mxu0 0.0
    %434 = vmatpush1.msra.mxu0 0.0
    %435 = vmatprep.subr.mxu0 0.0
    %436 = vmatpush1.msra.mxu0 0.0
    %437 = vmatprep.mubr.f32.mxu0 0.0
    %438 = vmatmul.mubr.f32.gmra.mrb[0].mxu0 %v368
    %v439 = vpop.f32.mrb[0].mxu0
    %v440 = vadd.f32 %v360, %v439
    %v441 = vpop.f32.mrb[0].mxu0
    %442 = vmatprep.mubr.f32.mxu0 0.0
    %443 = vmatmul.mubr.f32.gmra.mrb[0].mxu0 %v371
    %v444 = vpop.f32.mrb[0].mxu0
    %v445 = vpop.f32.mrb[0].mxu0
    %446 = vdwg.mxu0
    %447 = vst [vmem:[#allocation2] sm:$0x1] %v440
    // Predicated region
    $region30: #{tpu_custom_call.1} parent=1 // pred_check
      _
    $region31: #{tpu_custom_call.1} parent=1 // pred_check_branch
      %449 = sbr.rel (0) target = $region33
    $region32: #{tpu_custom_call.1} parent=1 // pred_region
      %s451 = ssub.s32 16, 16
      %452 = vsyncadd [#allocation3], %s451
      %s454 = sshll.u32 [#allocation2], 4
      %s455 = int_to_ptr.vmem [resolvable:$true] %s454
      %457 = dma.vmem_to_hbm [thread:$0]  %s455, 16, %s7, [#allocation3]
    $region33: #{tpu_custom_call.1} parent=1 // pred_fallthru
      _
    // Predicated region
    $region34: #{tpu_custom_call.1} parent=1 // pred_check
      _
    $region35: #{tpu_custom_call.1} parent=1 // pred_check_branch
      %459 = sbr.rel (0) target = $region37
    $region36: #{tpu_custom_call.1} parent=1 // pred_region
      %460 = dma.done [#allocation3], 16
    $region37: #{tpu_custom_call.1} parent=1 // pred_fallthru
      _
    %461 = vsyncpa [#allocation3], 1

</llo_original>
